<compile_context>
chip_gen: v7x
topology: tpu7x:2x2x1
jax: 0.10.0
libtpu: 0.0.40
codegen_flags: <defaults>
</compile_context>

<pallas_src>
import jax
import jax.numpy as jnp
from jax import lax
from jax.experimental import pallas as pl
from jax.experimental.pallas import tpu as pltpu


def _round_up(x, m):
    return (x + m - 1) // m * m


def _ffnn_kernel(x_ref, w1_ref, b1_ref, w2_ref, b2_ref, w3_ref, b3_ref, o_ref):
    # x_ref: (tile_b, in) f32.  Weights in PyTorch (out, in) layout, biases (out, 1).
    x = x_ref[...]
    # h1 = w1 @ x.T -> (h1_dim, tile_b): batch lands on the 128-wide lane axis.
    h1 = lax.dot_general(
        w1_ref[...], x,
        dimension_numbers=(((1,), (1,)), ((), ())),
        preferred_element_type=jnp.float32)
    h1 = jnp.maximum(h1 + b1_ref[...], 0.0)
    h2 = jnp.dot(w2_ref[...], h1, preferred_element_type=jnp.float32)
    h2 = jnp.maximum(h2 + b2_ref[...], 0.0)
    y = jnp.dot(w3_ref[...], h2, preferred_element_type=jnp.float32)
    # TODO(synk): if a bundle dump shows the MXU pop path on the per-tile critical
    # path, move this tiny (4, 32) layer onto the VPU as 4 broadcast-FMA reductions.
    o_ref[...] = (y + b3_ref[...]).astype(o_ref.dtype)   # lane-dense (out, tile_b) store


def _pick_tile_b(B, max_tile=8192):
    """Large tiles to amortize per-step overhead; >=2 steps for v7x megacore when
    the batch is big enough to split; tiny batches use one full-extent block."""
    if B <= 256:
        return B                                    # single block (always legal)
    half = _round_up(-(-B // 2), 128)               # ceil(B/2), 128-aligned
    return max(128, min(max_tile, half))


def ffnn_forward(x, params, *, tile_b=None):
    """x: (B, input_size) float32.  params: w{1,2,3} (out,in), b{1,2,3} (out,1)."""
    B, in_size = x.shape
    h1_dim = params["w1"].shape[0]
    h2_dim = params["w2"].shape[0]
    out_size = params["w3"].shape[0]

    if tile_b is None:
        tile_b = _pick_tile_b(B)
    tile_b = int(tile_b)
    if tile_b >= B:
        tile_b = B                                  # full-extent block
    else:
        tile_b = max(128, _round_up(tile_b, 128))   # (8,128)-legal interior tiles
        if tile_b >= B:
            tile_b = B
    n_steps = pl.cdiv(B, tile_b)

    w1, b1 = params["w1"], params["b1"]
    w2, b2 = params["w2"], params["b2"]
    w3, b3 = params["w3"], params["b3"]

    in_specs = [
        pl.BlockSpec((tile_b, in_size), lambda i: (i, 0)),   # x tile (natural layout)
        pl.BlockSpec(w1.shape, lambda i: (0, 0)),            # resident weights/biases
        pl.BlockSpec(b1.shape, lambda i: (0, 0)),
        pl.BlockSpec(w2.shape, lambda i: (0, 0)),
        pl.BlockSpec(b2.shape, lambda i: (0, 0)),
        pl.BlockSpec(w3.shape, lambda i: (0, 0)),
        pl.BlockSpec(b3.shape, lambda i: (0, 0)),
    ]
    out_spec = pl.BlockSpec((out_size, tile_b), lambda i: (0, i))

    # VMEM sized to actual need (double-buffered x/out tiles + f32 intermediates +
    # weights + headroom), no artificial floor, capped v7x-safe (64 MiB physical).
    w_bytes = 4 * sum(int(params[k].size) for k in ("w1", "b1", "w2", "b2", "w3", "b3"))
    buf_bytes = 2 * tile_b * (in_size + out_size) * 4
    itm_bytes = 2 * (h1_dim + h2_dim) * tile_b * 4
    vmem_limit = int(min(40 << 20, buf_bytes + itm_bytes + 2 * w_bytes + (8 << 20)))

    flops = 2 * B * (in_size * h1_dim + h1_dim * h2_dim + h2_dim * out_size)
    bytes_accessed = B * (in_size + out_size) * 4 + w_bytes
    cost = pl.CostEstimate(flops=flops, transcendentals=0, bytes_accessed=bytes_accessed)

    yt = pl.pallas_call(
        _ffnn_kernel,
        out_shape=jax.ShapeDtypeStruct((out_size, B), jnp.float32),
        grid_spec=pltpu.PrefetchScalarGridSpec(
            num_scalar_prefetch=0,
            grid=(n_steps,),
            in_specs=in_specs,
            out_specs=out_spec,
        ),
        compiler_params=pltpu.CompilerParams(
            dimension_semantics=("parallel",),
            vmem_limit_bytes=vmem_limit,
        ),
        cost_estimate=cost,
    )(x.astype(jnp.float32), w1, b1, w2, b2, w3, b3)

    # Tiny (out_size, B) -> (B, out_size) transpose (16 B/row); kernel output is
    # lane-dense.  Callers that accept (out, B) layout can skip this.
    return yt.T.astype(x.dtype)


def init_params(key, input_size, output_size, hidden=(64, 32)):
    """PyTorch nn.Linear-style init: W (out, in), b stored as (out, 1)."""
    sizes = [input_size, *hidden, output_size]
    params = {}
    ks = jax.random.split(key, len(sizes) - 1)
    for li, (fan_in, fan_out) in enumerate(zip(sizes[:-1], sizes[1:]), start=1):
        bound = 1.0 / (fan_in ** 0.5)
        wk, bk = jax.random.split(ks[li - 1])
        params[f"w{li}"] = jax.random.uniform(
            wk, (fan_out, fan_in), jnp.float32, -bound, bound)
        params[f"b{li}"] = jax.random.uniform(
            bk, (fan_out, 1), jnp.float32, -bound, bound)
    return params


def ffnn_reference(x, params):
    """Plain-JAX f32 reference with the PyTorch module's semantics."""
    h = jnp.maximum(x @ params["w1"].T + params["b1"][:, 0], 0.0)
    h = jnp.maximum(h @ params["w2"].T + params["b2"][:, 0], 0.0)
    return h @ params["w3"].T + params["b3"][:, 0]


if __name__ == "__main__":
    key = jax.random.PRNGKey(0)
    pk, xk1, xk2 = jax.random.split(key, 3)

    input_size, output_size, hidden = 16, 4, (64, 32)
    params = init_params(pk, input_size, output_size, hidden)

    # Small batch: single full-extent block.
    x_small = jax.random.normal(xk1, (8, input_size), jnp.float32)
    y_small = jax.block_until_ready(ffnn_forward(x_small, params))
    assert y_small.shape == (8, output_size)
    assert jnp.allclose(y_small, ffnn_reference(x_small, params),
                        atol=1e-2, rtol=1e-2), "mismatch vs reference (small batch)"

    # Ragged medium batch: 2-step "parallel" grid (tile_b=256) with a partial tail
    # block (no host-side padding), exercising masked tail writes.
    x_med = jax.random.normal(xk2, (300, input_size), jnp.float32)
    y_med = jax.block_until_ready(ffnn_forward(x_med, params))
    assert y_med.shape == (300, output_size)
    assert jnp.allclose(y_med, ffnn_reference(x_med, params),
                        atol=1e-2, rtol=1e-2), "mismatch vs reference (ragged batch)"

    print("KERNEL_OK")
</pallas_src>

<mosaic_0001>
module attributes {stable_mosaic.version = 11 : i64} {
  func.func @_ffnn_kernel(%arg0: i32, %arg1: memref<8x16xf32, #tpu.memory_space<vmem>>, %arg2: memref<64x16xf32, #tpu.memory_space<vmem>>, %arg3: memref<64x1xf32, #tpu.memory_space<vmem>>, %arg4: memref<32x64xf32, #tpu.memory_space<vmem>>, %arg5: memref<32x1xf32, #tpu.memory_space<vmem>>, %arg6: memref<4x32xf32, #tpu.memory_space<vmem>>, %arg7: memref<4x1xf32, #tpu.memory_space<vmem>>, %arg8: memref<4x8xf32, #tpu.memory_space<vmem>>) attributes {dimension_semantics = [#tpu.dimension_semantics<parallel>], iteration_bounds = array<i64: 1>, scalar_prefetch = 0 : i64, scratch_operands = 0 : i64, tpu.core_type = #tpu.core_type<tc>, window_params = [{transform_indices = @transform_0, window_bounds = array<i64: 8, 16>}, {pipeline_mode = #tpu.pipeline_mode<synchronous>, transform_indices = @transform_1, window_bounds = array<i64: 64, 16>}, {pipeline_mode = #tpu.pipeline_mode<synchronous>, transform_indices = @transform_2, window_bounds = array<i64: 64, 1>}, {pipeline_mode = #tpu.pipeline_mode<synchronous>, transform_indices = @transform_3, window_bounds = array<i64: 32, 64>}, {pipeline_mode = #tpu.pipeline_mode<synchronous>, transform_indices = @transform_4, window_bounds = array<i64: 32, 1>}, {pipeline_mode = #tpu.pipeline_mode<synchronous>, transform_indices = @transform_5, window_bounds = array<i64: 4, 32>}, {pipeline_mode = #tpu.pipeline_mode<synchronous>, transform_indices = @transform_6, window_bounds = array<i64: 4, 1>}, {transform_indices = @transform_7, window_bounds = array<i64: 4, 8>}]} {
    %c0 = arith.constant 0 : index
    %c0_0 = arith.constant 0 : index
    %0 = vector.load %arg1[%c0, %c0_0] : memref<8x16xf32, #tpu.memory_space<vmem>>, vector<8x16xf32>
    %c0_1 = arith.constant 0 : index
    %c0_2 = arith.constant 0 : index
    %1 = vector.load %arg2[%c0_1, %c0_2] : memref<64x16xf32, #tpu.memory_space<vmem>>, vector<64x16xf32>
    %cst = arith.constant dense<0.000000e+00> : vector<64x8xf32>
    %2 = tpu.matmul %1, %0, %cst {dimension_numbers = #tpu.dot_dimension_numbers<[1], [1], [0], [0], [0, 0, 1, 0], [], []>} : vector<64x16xf32>, vector<8x16xf32>, vector<64x8xf32> -> vector<64x8xf32>
    %c0_3 = arith.constant 0 : index
    %c0_4 = arith.constant 0 : index
    %3 = vector.load %arg3[%c0_3, %c0_4] : memref<64x1xf32, #tpu.memory_space<vmem>>, vector<64x1xf32>
    %4 = vector.broadcast %3 : vector<64x1xf32> to vector<64x8xf32>
    %5 = arith.addf %2, %4 : vector<64x8xf32>
    %cst_5 = arith.constant 0.000000e+00 : f32
    %6 = vector.broadcast %cst_5 : f32 to vector<64x8xf32>
    %7 = arith.maximumf %5, %6 : vector<64x8xf32>
    %c0_6 = arith.constant 0 : index
    %c0_7 = arith.constant 0 : index
    %8 = vector.load %arg4[%c0_6, %c0_7] : memref<32x64xf32, #tpu.memory_space<vmem>>, vector<32x64xf32>
    %cst_8 = arith.constant dense<0.000000e+00> : vector<32x8xf32>
    %9 = tpu.matmul %8, %7, %cst_8 {dimension_numbers = #tpu.dot_dimension_numbers<[1], [0], [0], [1], [0, 0, 1, 1], [], []>} : vector<32x64xf32>, vector<64x8xf32>, vector<32x8xf32> -> vector<32x8xf32>
    %c0_9 = arith.constant 0 : index
    %c0_10 = arith.constant 0 : index
    %10 = vector.load %arg5[%c0_9, %c0_10] : memref<32x1xf32, #tpu.memory_space<vmem>>, vector<32x1xf32>
    %11 = vector.broadcast %10 : vector<32x1xf32> to vector<32x8xf32>
    %12 = arith.addf %9, %11 : vector<32x8xf32>
    %cst_11 = arith.constant 0.000000e+00 : f32
    %13 = vector.broadcast %cst_11 : f32 to vector<32x8xf32>
    %14 = arith.maximumf %12, %13 : vector<32x8xf32>
    %c0_12 = arith.constant 0 : index
    %c0_13 = arith.constant 0 : index
    %15 = vector.load %arg6[%c0_12, %c0_13] : memref<4x32xf32, #tpu.memory_space<vmem>>, vector<4x32xf32>
    %cst_14 = arith.constant dense<0.000000e+00> : vector<4x8xf32>
    %16 = tpu.matmul %15, %14, %cst_14 {dimension_numbers = #tpu.dot_dimension_numbers<[1], [0], [0], [1], [0, 0, 1, 1], [], []>} : vector<4x32xf32>, vector<32x8xf32>, vector<4x8xf32> -> vector<4x8xf32>
    %c0_15 = arith.constant 0 : index
    %c0_16 = arith.constant 0 : index
    %17 = vector.load %arg7[%c0_15, %c0_16] : memref<4x1xf32, #tpu.memory_space<vmem>>, vector<4x1xf32>
    %18 = vector.broadcast %17 : vector<4x1xf32> to vector<4x8xf32>
    %19 = arith.addf %16, %18 : vector<4x8xf32>
    %c0_17 = arith.constant 0 : index
    %c0_18 = arith.constant 0 : index
    %20 = vector.load %arg8[%c0_17, %c0_18] : memref<4x8xf32, #tpu.memory_space<vmem>>, vector<4x8xf32>
    tpu.vector_store %arg8[%c0_17, %c0_18], %19 {strides = array<i32>} : memref<4x8xf32, #tpu.memory_space<vmem>>, vector<4x8xf32>,
    return
  }
  func.func @transform_0(%arg0: i32) -> (i32, i32) {
    %c0_i32 = arith.constant 0 : i32
    %c0_i32_0 = arith.constant 0 : i32
    return %arg0, %c0_i32 : i32, i32
  }
  func.func @transform_1(%arg0: i32) -> (i32, i32) {
    %c0_i32 = arith.constant 0 : i32
    %c0_i32_0 = arith.constant 0 : i32
    %c0_i32_1 = arith.constant 0 : i32
    return %c0_i32, %c0_i32_0 : i32, i32
  }
  func.func @transform_2(%arg0: i32) -> (i32, i32) {
    %c0_i32 = arith.constant 0 : i32
    %c0_i32_0 = arith.constant 0 : i32
    %c0_i32_1 = arith.constant 0 : i32
    return %c0_i32, %c0_i32_0 : i32, i32
  }
  func.func @transform_3(%arg0: i32) -> (i32, i32) {
    %c0_i32 = arith.constant 0 : i32
    %c0_i32_0 = arith.constant 0 : i32
    %c0_i32_1 = arith.constant 0 : i32
    return %c0_i32, %c0_i32_0 : i32, i32
  }
  func.func @transform_4(%arg0: i32) -> (i32, i32) {
    %c0_i32 = arith.constant 0 : i32
    %c0_i32_0 = arith.constant 0 : i32
    %c0_i32_1 = arith.constant 0 : i32
    return %c0_i32, %c0_i32_0 : i32, i32
  }
  func.func @transform_5(%arg0: i32) -> (i32, i32) {
    %c0_i32 = arith.constant 0 : i32
    %c0_i32_0 = arith.constant 0 : i32
    %c0_i32_1 = arith.constant 0 : i32
    return %c0_i32, %c0_i32_0 : i32, i32
  }
  func.func @transform_6(%arg0: i32) -> (i32, i32) {
    %c0_i32 = arith.constant 0 : i32
    %c0_i32_0 = arith.constant 0 : i32
    %c0_i32_1 = arith.constant 0 : i32
    return %c0_i32, %c0_i32_0 : i32, i32
  }
  func.func @transform_7(%arg0: i32) -> (i32, i32) {
    %c0_i32 = arith.constant 0 : i32
    %c0_i32_0 = arith.constant 0 : i32
    return %c0_i32, %arg0 : i32, i32
  }
}

</mosaic_0001>

<llo_original>
// kernel: tpu_custom_call.1
$region0: #{tpu_custom_call.1}
  #allocation0 [shape = 'u32[]', space=smem, size = 0x4, offset = 0x4, fixed_abs, tag = 'smem constant byte address 0x4 - core index']
  #allocation1 [shape = 'u32[144,128]{1,0:T(1,128)}', space=vmem, size = 0x12000, scoped, tag = 'internal scratch']
  %s0 = inlined_call_operand.vmem [shape: f32[8,16], index: 0, kind: input, shape index: {}]
  %s1 = inlined_call_operand.vmem [shape: f32[64,16], index: 1, kind: input, shape index: {}]
  %s2 = inlined_call_operand.vmem [shape: f32[64,1], index: 2, kind: input, shape index: {}]
  %s3 = inlined_call_operand.vmem [shape: f32[32,64], index: 3, kind: input, shape index: {}]
  %s4 = inlined_call_operand.vmem [shape: f32[32,1], index: 4, kind: input, shape index: {}]
  %s5 = inlined_call_operand.vmem [shape: f32[4,32], index: 5, kind: input, shape index: {}]
  %s6 = inlined_call_operand.vmem [shape: f32[4,1], index: 6, kind: input, shape index: {}]
  %s7 = inlined_call_operand.hbm [shape: f32[4,8], index: 7, kind: output, shape index: {}]
  %s8 = sld [smem:[#allocation0]]
  $region38: #{tpu_custom_call.1} parent=0
    _
  %s10 = ssub.s32 1, %s8
  %s11 = scalar_select 0, %s10, %s8
  $region1: #{tpu_custom_call.1} parent=0
    #allocation2 [shape = 'u8[2048]{0}', space=vmem, size = 0x800, scoped, tag = 'output window, operand 0, single buffered']
    #allocation3 [shape = 's32[1]{0}', space=sflag, size = 0x4, scoped, tag = 'scoped memory for tpu_custom_call.1']
    %12 = vsyncpa [#allocation3], 0
    // Predicated region
    $region2: #{tpu_custom_call.1} parent=1 // pred_check
      _
    $region3: #{tpu_custom_call.1} parent=1 // pred_check_branch
      %14 = sbr.rel (0) target = $region5
    $region4: #{tpu_custom_call.1} parent=1 // pred_region
      _
    $region5: #{tpu_custom_call.1} parent=1 // pred_fallthru
      _
    // Predicated region
    $region6: #{tpu_custom_call.1} parent=1 // pred_check
      _
    $region7: #{tpu_custom_call.1} parent=1 // pred_check_branch
      %16 = sbr.rel (0) target = $region9
    $region8: #{tpu_custom_call.1} parent=1 // pred_region
      _
    $region9: #{tpu_custom_call.1} parent=1 // pred_fallthru
      _
    // Predicated region
    $region10: #{tpu_custom_call.1} parent=1 // pred_check
      _
    $region11: #{tpu_custom_call.1} parent=1 // pred_check_branch
      %18 = sbr.rel (0) target = $region13
    $region12: #{tpu_custom_call.1} parent=1 // pred_region
      _
    $region13: #{tpu_custom_call.1} parent=1 // pred_fallthru
      _
    // Predicated region
    $region14: #{tpu_custom_call.1} parent=1 // pred_check
      _
    $region15: #{tpu_custom_call.1} parent=1 // pred_check_branch
      %20 = sbr.rel (0) target = $region17
    $region16: #{tpu_custom_call.1} parent=1 // pred_region
      _
    $region17: #{tpu_custom_call.1} parent=1 // pred_fallthru
      _
    // Predicated region
    $region18: #{tpu_custom_call.1} parent=1 // pred_check
      _
    $region19: #{tpu_custom_call.1} parent=1 // pred_check_branch
      %22 = sbr.rel (0) target = $region21
    $region20: #{tpu_custom_call.1} parent=1 // pred_region
      _
    $region21: #{tpu_custom_call.1} parent=1 // pred_fallthru
      _
    // Predicated region
    $region22: #{tpu_custom_call.1} parent=1 // pred_check
      _
    $region23: #{tpu_custom_call.1} parent=1 // pred_check_branch
      %24 = sbr.rel (0) target = $region25
    $region24: #{tpu_custom_call.1} parent=1 // pred_region
      _
    $region25: #{tpu_custom_call.1} parent=1 // pred_fallthru
      _
    // Predicated region
    $region26: #{tpu_custom_call.1} parent=1 // pred_check
      _
    $region27: #{tpu_custom_call.1} parent=1 // pred_check_branch
      %26 = sbr.rel (0) target = $region29
    $region28: #{tpu_custom_call.1} parent=1 // pred_region
      _
    $region29: #{tpu_custom_call.1} parent=1 // pred_fallthru
      _
    %v27 = vld [vmem:[%s0] sm:$0xff]
    %v28 = vld [vmem:[%s1] sm:$0xff]
    %v29 = vld [vmem:[%s1 + $0x8] sm:$0xff]
    %v30 = vld [vmem:[%s1 + $0x10] sm:$0xff]
    %v31 = vld [vmem:[%s1 + $0x18] sm:$0xff]
    %v32 = vld [vmem:[%s1 + $0x20] sm:$0xff]
    %v33 = vld [vmem:[%s1 + $0x28] sm:$0xff]
    %v34 = vld [vmem:[%s1 + $0x30] sm:$0xff]
    %v35 = vld [vmem:[%s1 + $0x38] sm:$0xff]
    %v36 = vld [vmem:[%s2] sm:$0xff]
    %v37 = vld [vmem:[%s2 + $0x8] sm:$0xff]
    %v38 = vld [vmem:[%s2 + $0x10] sm:$0xff]
    %v39 = vld [vmem:[%s2 + $0x18] sm:$0xff]
    %v40 = vld [vmem:[%s2 + $0x20] sm:$0xff]
    %v41 = vld [vmem:[%s2 + $0x28] sm:$0xff]
    %v42 = vld [vmem:[%s2 + $0x30] sm:$0xff]
    %v43 = vld [vmem:[%s2 + $0x38] sm:$0xff]
    %45 = vset.pattern.permute.xlu0 0
    %46 = vperm.xlu0 %45, %v36
    %v47 = vpop.permute.xlu0 %46
    %50 = vset.pattern.permute.xlu0 0
    %51 = vperm.xlu0 %50, %v37
    %v52 = vpop.permute.xlu0 %51
    %55 = vset.pattern.permute.xlu0 0
    %56 = vperm.xlu0 %55, %v38
    %v57 = vpop.permute.xlu0 %56
    %60 = vset.pattern.permute.xlu0 0
    %61 = vperm.xlu0 %60, %v39
    %v62 = vpop.permute.xlu0 %61
    %65 = vset.pattern.permute.xlu0 0
    %66 = vperm.xlu0 %65, %v40
    %v67 = vpop.permute.xlu0 %66
    %70 = vset.pattern.permute.xlu0 0
    %71 = vperm.xlu0 %70, %v41
    %v72 = vpop.permute.xlu0 %71
    %75 = vset.pattern.permute.xlu0 0
    %76 = vperm.xlu0 %75, %v42
    %v77 = vpop.permute.xlu0 %76
    %80 = vset.pattern.permute.xlu0 0
    %81 = vperm.xlu0 %80, %v43
    %v82 = vpop.permute.xlu0 %81
    %vm84 = vcmask 130048
    %v86 = vsel %vm84, %v28, 0
    %v89 = vsel %vm84, %v29, 0
    %v92 = vsel %vm84, %v30, 0
    %v95 = vsel %vm84, %v31, 0
    %v98 = vsel %vm84, %v32, 0
    %v101 = vsel %vm84, %v33, 0
    %v104 = vsel %vm84, %v34, 0
    %v107 = vsel %vm84, %v35, 0
    %v110 = vsel %vm84, %v27, 0
    %112 = vmatprep.subr.mxu0 0.0
    %113 = vmatpush1.xpose.msra.mxu0 %v110
    %114 = vmatprep.subr.mxu0 0.0
    %115 = vmatpush1.xpose.msra.mxu0 0.0
    %116 = vmatprep.subr.mxu0 0.0
    %117 = vmatpush1.xpose.msra.mxu0 0.0
    %118 = vmatprep.subr.mxu0 0.0
    %119 = vmatpush1.xpose.msra.mxu0 0.0
    %120 = vmatprep.subr.mxu0 0.0
    %121 = vmatpush1.xpose.msra.mxu0 0.0
    %122 = vmatprep.subr.mxu0 0.0
    %123 = vmatpush1.xpose.msra.mxu0 0.0
    %124 = vmatprep.subr.mxu0 0.0
    %125 = vmatpush1.xpose.msra.mxu0 0.0
    %126 = vmatprep.subr.mxu0 0.0
    %127 = vmatpush1.xpose.msra.mxu0 0.0
    %128 = vmatprep.subr.mxu0 0.0
    %129 = vmatpush1.xpose.msra.mxu0 0.0
    %130 = vmatprep.subr.mxu0 0.0
    %131 = vmatpush1.xpose.msra.mxu0 0.0
    %132 = vmatprep.subr.mxu0 0.0
    %133 = vmatpush1.xpose.msra.mxu0 0.0
    %134 = vmatprep.subr.mxu0 0.0
    %135 = vmatpush1.xpose.msra.mxu0 0.0
    %136 = vmatprep.subr.mxu0 0.0
    %137 = vmatpush1.xpose.msra.mxu0 0.0
    %138 = vmatprep.subr.mxu0 0.0
    %139 = vmatpush1.xpose.msra.mxu0 0.0
    %140 = vmatprep.subr.mxu0 0.0
    %141 = vmatpush1.xpose.msra.mxu0 0.0
    %142 = vmatprep.subr.mxu0 0.0
    %143 = vmatpush1.xpose.msra.mxu0 0.0
    %144 = vmatprep.subr.mxu0 0.0
    %145 = vmatpush1.xpose.msra.mxu0 0.0
    %146 = vmatprep.subr.mxu0 0.0
    %147 = vmatpush1.xpose.msra.mxu0 0.0
    %148 = vmatprep.subr.mxu0 0.0
    %149 = vmatpush1.xpose.msra.mxu0 0.0
    %150 = vmatprep.subr.mxu0 0.0
    %151 = vmatpush1.xpose.msra.mxu0 0.0
    %152 = vmatprep.subr.mxu0 0.0
    %153 = vmatpush1.xpose.msra.mxu0 0.0
    %154 = vmatprep.subr.mxu0 0.0
    %155 = vmatpush1.xpose.msra.mxu0 0.0
    %156 = vmatprep.subr.mxu0 0.0
    %157 = vmatpush1.xpose.msra.mxu0 0.0
    %158 = vmatprep.subr.mxu0 0.0
    %159 = vmatpush1.xpose.msra.mxu0 0.0
    %160 = vmatprep.subr.mxu0 0.0
    %161 = vmatpush1.xpose.msra.mxu0 0.0
    %162 = vmatprep.subr.mxu0 0.0
    %163 = vmatpush1.xpose.msra.mxu0 0.0
    %164 = vmatprep.subr.mxu0 0.0
    %165 = vmatpush1.xpose.msra.mxu0 0.0
    %166 = vmatprep.subr.mxu0 0.0
    %167 = vmatpush1.xpose.msra.mxu0 0.0
    %168 = vmatprep.subr.mxu0 0.0
    %169 = vmatpush1.xpose.msra.mxu0 0.0
    %170 = vmatprep.subr.mxu0 0.0
    %171 = vmatpush1.xpose.msra.mxu0 0.0
    %172 = vmatprep.subr.mxu0 0.0
    %173 = vmatpush1.xpose.msra.mxu0 0.0
    %174 = vmatprep.subr.mxu0 0.0
    %175 = vmatpush1.xpose.msra.mxu0 0.0
    %176 = vmatprep.mubr.f32.mxu0 0.0
    %177 = vmatmul.mubr.f32.gmra.mrb[0].mxu0 %v86
    %v178 = vpop.f32.mrb[0].mxu0
    %v179 = vadd.f32 %v47, %v178
    %v180 = vpop.f32.mrb[0].mxu0
    %181 = vmatprep.mubr.f32.mxu0 0.0
    %182 = vmatmul.mubr.f32.gmra.mrb[0].mxu0 %v89
    %v183 = vpop.f32.mrb[0].mxu0
    %v184 = vadd.f32 %v52, %v183
    %v185 = vpop.f32.mrb[0].mxu0
    %186 = vmatprep.mubr.f32.mxu0 0.0
    %187 = vmatmul.mubr.f32.gmra.mrb[0].mxu0 %v92
    %v188 = vpop.f32.mrb[0].mxu0
    %v189 = vadd.f32 %v57, %v188
    %v190 = vpop.f32.mrb[0].mxu0
    %191 = vmatprep.mubr.f32.mxu0 0.0
    %192 = vmatmul.mubr.f32.gmra.mrb[0].mxu0 %v95
    %v193 = vpop.f32.mrb[0].mxu0
    %v194 = vadd.f32 %v62, %v193
    %v195 = vpop.f32.mrb[0].mxu0
    %196 = vmatprep.mubr.f32.mxu0 0.0
    %197 = vmatmul.mubr.f32.gmra.mrb[0].mxu0 %v98
    %v198 = vpop.f32.mrb[0].mxu0
    %v199 = vadd.f32 %v67, %v198
    %v200 = vpop.f32.mrb[0].mxu0
    %201 = vmatprep.mubr.f32.mxu0 0.0
    %202 = vmatmul.mubr.f32.gmra.mrb[0].mxu0 %v101
    %v203 = vpop.f32.mrb[0].mxu0
    %v204 = vadd.f32 %v72, %v203
    %v205 = vpop.f32.mrb[0].mxu0
    %206 = vmatprep.mubr.f32.mxu0 0.0
    %207 = vmatmul.mubr.f32.gmra.mrb[0].mxu0 %v104
    %v208 = vpop.f32.mrb[0].mxu0
    %v209 = vadd.f32 %v77, %v208
    %v210 = vpop.f32.mrb[0].mxu0
    %211 = vmatprep.mubr.f32.mxu0 0.0
    %212 = vmatmul.mubr.f32.gmra.mrb[0].mxu0 %v107
    %v213 = vpop.f32.mrb[0].mxu0
    %v214 = vadd.f32 %v82, %v213
    %v215 = vpop.f32.mrb[0].mxu0
    %216 = vdwg.mxu0
    %v217 = vmax.f32 %v179, 0.0
    %v218 = vmax.f32 %v184, 0.0
    %v219 = vmax.f32 %v189, 0.0
    %v220 = vmax.f32 %v194, 0.0
    %v221 = vmax.f32 %v199, 0.0
    %v222 = vmax.f32 %v204, 0.0
    %v223 = vmax.f32 %v209, 0.0
    %v224 = vmax.f32 %v214, 0.0
    %v225 = vld [vmem:[%s3] sm:$0xff]
    %v226 = vld [vmem:[%s3 + $0x8] sm:$0xff]
    %v227 = vld [vmem:[%s3 + $0x10] sm:$0xff]
    %v228 = vld [vmem:[%s3 + $0x18] sm:$0xff]
    %v229 = vld [vmem:[%s4] sm:$0xff]
    %v230 = vld [vmem:[%s4 + $0x8] sm:$0xff]
    %v231 = vld [vmem:[%s4 + $0x10] sm:$0xff]
    %v232 = vld [vmem:[%s4 + $0x18] sm:$0xff]
    %234 = vset.pattern.permute.xlu0 0
    %235 = vperm.xlu0 %234, %v229
    %v236 = vpop.permute.xlu0 %235
    %239 = vset.pattern.permute.xlu0 0
    %240 = vperm.xlu0 %239, %v230
    %v241 = vpop.permute.xlu0 %240
    %244 = vset.pattern.permute.xlu0 0
    %245 = vperm.xlu0 %244, %v231
    %v246 = vpop.permute.xlu0 %245
    %249 = vset.pattern.permute.xlu0 0
    %250 = vperm.xlu0 %249, %v232
    %v251 = vpop.permute.xlu0 %250
    %vm253 = vcmask 523264
    %v255 = vsel %vm253, %v225, 0
    %v258 = vsel %vm253, %v226, 0
    %v261 = vsel %vm253, %v227, 0
    %v264 = vsel %vm253, %v228, 0
    %266 = vmatprep.subr.mxu0 0.0
    %267 = vmatpush1.msra.mxu0 %v217
    %268 = vmatprep.subr.mxu0 0.0
    %269 = vmatpush1.msra.mxu0 %v218
    %270 = vmatprep.subr.mxu0 0.0
    %271 = vmatpush1.msra.mxu0 %v219
    %272 = vmatprep.subr.mxu0 0.0
    %273 = vmatpush1.msra.mxu0 %v220
    %274 = vmatprep.subr.mxu0 0.0
    %275 = vmatpush1.msra.mxu0 %v221
    %276 = vmatprep.subr.mxu0 0.0
    %277 = vmatpush1.msra.mxu0 %v222
    %278 = vmatprep.subr.mxu0 0.0
    %279 = vmatpush1.msra.mxu0 %v223
    %280 = vmatprep.subr.mxu0 0.0
    %281 = vmatpush1.msra.mxu0 %v224
    %282 = vmatprep.subr.mxu0 0.0
    %283 = vmatpush1.msra.mxu0 0.0
    %284 = vmatprep.subr.mxu0 0.0
    %285 = vmatpush1.msra.mxu0 0.0
    %286 = vmatprep.subr.mxu0 0.0
    %287 = vmatpush1.msra.mxu0 0.0
    %288 = vmatprep.subr.mxu0 0.0
    %289 = vmatpush1.msra.mxu0 0.0
    %290 = vmatprep.subr.mxu0 0.0
    %291 = vmatpush1.msra.mxu0 0.0
    %292 = vmatprep.subr.mxu0 0.0
    %293 = vmatpush1.msra.mxu0 0.0
    %294 = vmatprep.subr.mxu0 0.0
    %295 = vmatpush1.msra.mxu0 0.0
    %296 = vmatprep.subr.mxu0 0.0
    %297 = vmatpush1.msra.mxu0 0.0
    %298 = vmatprep.subr.mxu0 0.0
    %299 = vmatpush1.msra.mxu0 0.0
    %300 = vmatprep.subr.mxu0 0.0
    %301 = vmatpush1.msra.mxu0 0.0
    %302 = vmatprep.subr.mxu0 0.0
    %303 = vmatpush1.msra.mxu0 0.0
    %304 = vmatprep.subr.mxu0 0.0
    %305 = vmatpush1.msra.mxu0 0.0
    %306 = vmatprep.subr.mxu0 0.0
    %307 = vmatpush1.msra.mxu0 0.0
    %308 = vmatprep.subr.mxu0 0.0
    %309 = vmatpush1.msra.mxu0 0.0
    %310 = vmatprep.subr.mxu0 0.0
    %311 = vmatpush1.msra.mxu0 0.0
    %312 = vmatprep.subr.mxu0 0.0
    %313 = vmatpush1.msra.mxu0 0.0
    %314 = vmatprep.subr.mxu0 0.0
    %315 = vmatpush1.msra.mxu0 0.0
    %316 = vmatprep.subr.mxu0 0.0
    %317 = vmatpush1.msra.mxu0 0.0
    %318 = vmatprep.subr.mxu0 0.0
    %319 = vmatpush1.msra.mxu0 0.0
    %320 = vmatprep.subr.mxu0 0.0
    %321 = vmatpush1.msra.mxu0 0.0
    %322 = vmatprep.subr.mxu0 0.0
    %323 = vmatpush1.msra.mxu0 0.0
    %324 = vmatprep.subr.mxu0 0.0
    %325 = vmatpush1.msra.mxu0 0.0
    %326 = vmatprep.subr.mxu0 0.0
    %327 = vmatpush1.msra.mxu0 0.0
    %328 = vmatprep.subr.mxu0 0.0
    %329 = vmatpush1.msra.mxu0 0.0
    %330 = vmatprep.mubr.f32.mxu0 0.0
    %331 = vmatmul.mubr.f32.gmra.mrb[0].mxu0 %v255
    %v332 = vpop.f32.mrb[0].mxu0
    %v333 = vadd.f32 %v236, %v332
    %v334 = vpop.f32.mrb[0].mxu0
    %335 = vmatprep.mubr.f32.mxu0 0.0
    %336 = vmatmul.mubr.f32.gmra.mrb[0].mxu0 %v258
    %v337 = vpop.f32.mrb[0].mxu0
    %v338 = vadd.f32 %v241, %v337
    %v339 = vpop.f32.mrb[0].mxu0
    %340 = vmatprep.mubr.f32.mxu0 0.0
    %341 = vmatmul.mubr.f32.gmra.mrb[0].mxu0 %v261
    %v342 = vpop.f32.mrb[0].mxu0
    %v343 = vadd.f32 %v246, %v342
    %v344 = vpop.f32.mrb[0].mxu0
    %345 = vmatprep.mubr.f32.mxu0 0.0
    %346 = vmatmul.mubr.f32.gmra.mrb[0].mxu0 %v264
    %v347 = vpop.f32.mrb[0].mxu0
    %v348 = vadd.f32 %v251, %v347
    %v349 = vpop.f32.mrb[0].mxu0
    %350 = vdwg.mxu0
    %v351 = vmax.f32 %v333, 0.0
    %v352 = vmax.f32 %v338, 0.0
    %v353 = vmax.f32 %v343, 0.0
    %v354 = vmax.f32 %v348, 0.0
    %v355 = vld [vmem:[%s5] sm:$0xf]
    %v356 = vld [vmem:[%s6] sm:$0xf]
    %358 = vset.pattern.permute.xlu0 0
    %359 = vperm.xlu0 %358, %v356
    %v360 = vpop.permute.xlu0 %359
    %vm362 = vcmask 261120
    %v364 = vsel %vm362, %v355, 0
    %366 = vmatprep.subr.mxu0 0.0
    %367 = vmatpush1.msra.mxu0 %v351
    %368 = vmatprep.subr.mxu0 0.0
    %369 = vmatpush1.msra.mxu0 %v352
    %370 = vmatprep.subr.mxu0 0.0
    %371 = vmatpush1.msra.mxu0 %v353
    %372 = vmatprep.subr.mxu0 0.0
    %373 = vmatpush1.msra.mxu0 %v354
    %374 = vmatprep.subr.mxu0 0.0
    %375 = vmatpush1.msra.mxu0 0.0
    %376 = vmatprep.subr.mxu0 0.0
    %377 = vmatpush1.msra.mxu0 0.0
    %378 = vmatprep.subr.mxu0 0.0
    %379 = vmatpush1.msra.mxu0 0.0
    %380 = vmatprep.subr.mxu0 0.0
    %381 = vmatpush1.msra.mxu0 0.0
    %382 = vmatprep.subr.mxu0 0.0
    %383 = vmatpush1.msra.mxu0 0.0
    %384 = vmatprep.subr.mxu0 0.0
    %385 = vmatpush1.msra.mxu0 0.0
    %386 = vmatprep.subr.mxu0 0.0
    %387 = vmatpush1.msra.mxu0 0.0
    %388 = vmatprep.subr.mxu0 0.0
    %389 = vmatpush1.msra.mxu0 0.0
    %390 = vmatprep.subr.mxu0 0.0
    %391 = vmatpush1.msra.mxu0 0.0
    %392 = vmatprep.subr.mxu0 0.0
    %393 = vmatpush1.msra.mxu0 0.0
    %394 = vmatprep.subr.mxu0 0.0
    %395 = vmatpush1.msra.mxu0 0.0
    %396 = vmatprep.subr.mxu0 0.0
    %397 = vmatpush1.msra.mxu0 0.0
    %398 = vmatprep.subr.mxu0 0.0
    %399 = vmatpush1.msra.mxu0 0.0
    %400 = vmatprep.subr.mxu0 0.0
    %401 = vmatpush1.msra.mxu0 0.0
    %402 = vmatprep.subr.mxu0 0.0
    %403 = vmatpush1.msra.mxu0 0.0
    %404 = vmatprep.subr.mxu0 0.0
    %405 = vmatpush1.msra.mxu0 0.0
    %406 = vmatprep.subr.mxu0 0.0
    %407 = vmatpush1.msra.mxu0 0.0
    %408 = vmatprep.subr.mxu0 0.0
    %409 = vmatpush1.msra.mxu0 0.0
    %410 = vmatprep.subr.mxu0 0.0
    %411 = vmatpush1.msra.mxu0 0.0
    %412 = vmatprep.subr.mxu0 0.0
    %413 = vmatpush1.msra.mxu0 0.0
    %414 = vmatprep.subr.mxu0 0.0
    %415 = vmatpush1.msra.mxu0 0.0
    %416 = vmatprep.subr.mxu0 0.0
    %417 = vmatpush1.msra.mxu0 0.0
    %418 = vmatprep.subr.mxu0 0.0
    %419 = vmatpush1.msra.mxu0 0.0
    %420 = vmatprep.subr.mxu0 0.0
    %421 = vmatpush1.msra.mxu0 0.0
    %422 = vmatprep.subr.mxu0 0.0
    %423 = vmatpush1.msra.mxu0 0.0
    %424 = vmatprep.subr.mxu0 0.0
    %425 = vmatpush1.msra.mxu0 0.0
    %426 = vmatprep.subr.mxu0 0.0
    %427 = vmatpush1.msra.mxu0 0.0
    %428 = vmatprep.subr.mxu0 0.0
    %429 = vmatpush1.msra.mxu0 0.0
    %430 = vmatprep.mubr.f32.mxu0 0.0
    %431 = vmatmul.mubr.f32.gmra.mrb[0].mxu0 %v364
    %v432 = vpop.f32.mrb[0].mxu0
    %v433 = vadd.f32 %v360, %v432
    %v434 = vpop.f32.mrb[0].mxu0
    %435 = vdwg.mxu0
    %vm436 = vcmask 60416
    %437 = vst.msk [vmem:[#allocation2] sm:$0xf] %vm436, %v433
    // Predicated region
    $region30: #{tpu_custom_call.1} parent=1 // pred_check
      _
    $region31: #{tpu_custom_call.1} parent=1 // pred_check_branch
      %439 = sbr.rel (0) target = $region33
    $region32: #{tpu_custom_call.1} parent=1 // pred_region
      %s441 = ssub.s32 64, 64
      %442 = vsyncadd [#allocation3], %s441
      %s444 = sshll.u32 [#allocation2], 4
      %s445 = int_to_ptr.vmem [resolvable:$true] %s444
      %447 = dma.vmem_to_hbm [thread:$0]  %s445, 64, %s7, [#allocation3]
    $region33: #{tpu_custom_call.1} parent=1 // pred_fallthru
      _
    // Predicated region
    $region34: #{tpu_custom_call.1} parent=1 // pred_check
      _
    $region35: #{tpu_custom_call.1} parent=1 // pred_check_branch
      %449 = sbr.rel (0) target = $region37
    $region36: #{tpu_custom_call.1} parent=1 // pred_region
      %450 = dma.done [#allocation3], 64
    $region37: #{tpu_custom_call.1} parent=1 // pred_fallthru
      _
    %451 = vsyncpa [#allocation3], 1

</llo_original>
